<compile_context>
chip_gen: v6e
topology: v6e:2x2x1
jax: 0.10.0
libtpu: 0.0.40
codegen_flags: <defaults>
</compile_context>

<pallas_src>
import math
import functools

import jax
import jax.numpy as jnp
from jax.experimental import pallas as pl
from jax.experimental.pallas import tpu as pltpu


def _round_up(x, m):
    return ((x + m - 1) // m) * m


def _actor_critic_kernel(action_dim,
                         scal_ref,            # SMEM (2,) f32: [-1/(2 var), -(log_std + 0.5*log 2pi)]
                         x_ref, a_ref,        # VMEM [TILE_B, S], [TILE_B, A]  (batch-major as produced)
                         w1_ref, b1_ref,      # packed layer 1 (pre-transposed): [H1, S], [H1, 1]
                         w2_ref, b2_ref,      # block-diag layer 2: [H2, H1], [H2, 1]
                         w3_ref, b3_ref,      # block-diag layer 3: [OUT, H2], [OUT, 1]
                         out_ref):            # VMEM [OUT, TILE_B]: rows 0..A-1 logp, row A value
    # Feature-major pipeline: the batch rides the 128-wide lane axis everywhere,
    # so the final store is lane-dense.  The two small input transposes run on
    # the XLU, which is idle in this memory-bound kernel.  Transposes are done
    # in f32 (32-bit relayout); matmul operands may be bf16, accumulation and
    # all elementwise math stay f32.
    xT = x_ref[...].astype(jnp.float32).T                     # [S, TILE_B]
    aT = a_ref[...].astype(jnp.float32).T                     # [A, TILE_B]

    h = jnp.dot(w1_ref[...], xT.astype(w1_ref.dtype),
                preferred_element_type=jnp.float32) + b1_ref[...]
    h = jnp.maximum(h, 0.0)                                   # [H1, TILE_B]
    h = jnp.dot(w2_ref[...], h.astype(w2_ref.dtype),
                preferred_element_type=jnp.float32) + b2_ref[...]
    h = jnp.maximum(h, 0.0)                                   # [H2, TILE_B]
    y = jnp.dot(w3_ref[...], h.astype(w3_ref.dtype),
                preferred_element_type=jnp.float32) + b3_ref[...]   # [OUT, TILE_B]
    # rows 0..A-1 = mu (actor head), row A = state value (critic head)

    neg_inv_2var = scal_ref[0]
    logp_const = scal_ref[1]
    d = aT - y[:action_dim, :]
    out_ref[0:action_dim, :] = d * d * neg_inv_2var + logp_const    # logp rows
    out_ref[action_dim:action_dim + 1, :] = y[action_dim:action_dim + 1, :]  # value row


def pack_params(p, matmul_dtype=jnp.bfloat16):
    """Fuse actor/critic params into 3 packed, pre-transposed matmuls (done once)."""
    S = p["wa1"].shape[0]
    na1, na2 = p["wa1"].shape[1], p["wa2"].shape[1]
    nc1, nc2 = p["wc1"].shape[1], p["wc2"].shape[1]
    A = p["wa3"].shape[1]
    H1, H2, OUT = na1 + nc1, na2 + nc2, A + 1
    # NOTE: keep this block-diagonal packing only while each head's hidden size
    # is <= 128 (MXU lane granularity); beyond that, split layers 2/3 per head.

    w1 = jnp.concatenate([p["wa1"], p["wc1"]], axis=1)                 # [S, H1]
    b1 = jnp.concatenate([p["ba1"], p["bc1"]], axis=1)                 # [1, H1]
    w2 = jnp.zeros((H1, H2), jnp.float32)
    w2 = w2.at[:na1, :na2].set(p["wa2"]).at[na1:, na2:].set(p["wc2"])  # block-diag
    b2 = jnp.concatenate([p["ba2"], p["bc2"]], axis=1)                 # [1, H2]
    w3 = jnp.zeros((H2, OUT), jnp.float32)
    w3 = w3.at[:na2, :A].set(p["wa3"]).at[na2:, A:].set(p["wc3"])      # block-diag
    b3 = jnp.concatenate([p["ba3"], p["bc3"]], axis=1)                 # [1, A+1]

    # Pre-transpose so in-kernel matmuls are natural [M,K]@[K,N] with the batch
    # on the lane (N) axis -> lane-dense output, no per-step weight transposes.
    return dict(
        w1t=jnp.asarray(w1.T, matmul_dtype), b1t=jnp.asarray(b1.T, jnp.float32),
        w2t=jnp.asarray(w2.T, matmul_dtype), b2t=jnp.asarray(b2.T, jnp.float32),
        w3t=jnp.asarray(w3.T, matmul_dtype), b3t=jnp.asarray(b3.T, jnp.float32),
        state_dim=S, action_dim=A, matmul_dtype=matmul_dtype,
    )


def _generation_params(grid_len):
    """Pick vmem limit / dimension semantics for the local TPU generation."""
    vmem_limit = 32 * 1024 * 1024
    try:
        cap = getattr(pltpu.get_tpu_info(), "vmem_capacity_bytes", None)
        if cap:
            # v5e/v6e (128 MiB physical) -> 64 MiB; v7x (64 MiB) -> 32 MiB.
            vmem_limit = min(64 * 1024 * 1024, max(int(cap) // 2, 16 * 1024 * 1024))
    except Exception:
        pass
    dims = ("parallel",)
    try:
        kind = jax.devices()[0].device_kind.lower()
        if ("v7" in kind or kind.startswith("tpu7")) and grid_len > 1:
            # v7x has 2 TensorCores per chip; only CORE_PARALLEL reliably splits
            # the batch grid across them.
            dims = (pltpu.CORE_PARALLEL,)
    except Exception:
        pass
    return dims, vmem_limit


def actor_critic_evaluate(state, action, std_scale, packed, *,
                          tile_b=2048, feature_major_out=False):
    """Pallas implementation of ActorCritic.evaluate.

    Default return matches torch semantics:
      (action_logprobs [B, A], state_value [B], dist_entropy [B, A]).
    With feature_major_out=True the logp/entropy come back as [A, B] (the
    kernel's native lane-dense layout) and no wrapper-side transpose is done.
    """
    B, S = state.shape
    A = packed["action_dim"]
    OUT = A + 1
    H1 = packed["w1t"].shape[0]
    H2 = packed["w2t"].shape[0]
    assert S == packed["state_dim"]
    assert action.shape == (B, A)
    assert packed["w3t"].shape[0] == OUT

    # ---- tiling: big, 128-aligned batch tiles; no wrapper-side padding -------
    dims_sem_placeholder = None  # computed after grid is known
    _, vmem_limit = _generation_params(1)

    TILE_B = min(_round_up(max(tile_b, 128), 128), _round_up(B, 128))
    # Clamp to a VMEM budget: double-buffered x + a + out tiles (lane-padded).
    per_row = 2 * (128 * state.dtype.itemsize + 128 * 4 + 4 * _round_up(OUT, 8))
    budget = max(vmem_limit // 2, 4 * 1024 * 1024)
    max_rows = max(128, (budget // per_row) // 128 * 128)
    TILE_B = min(TILE_B, max_rows)

    grid = (pl.cdiv(B, TILE_B),)
    dims_sem, vmem_limit = _generation_params(grid[0])

    # ---- std-derived constants (no in-kernel divide/log) ----------------------
    std = jnp.asarray(std_scale, jnp.float32)
    scal = jnp.stack([
        -0.5 / (std * std),
        -(jnp.log(std) + 0.5 * math.log(2.0 * math.pi)),
    ]).astype(jnp.float32)

    kernel = functools.partial(_actor_critic_kernel, A)

    out = pl.pallas_call(
        kernel,
        out_shape=jax.ShapeDtypeStruct((OUT, B), jnp.float32),   # feature-major, lane-dense
        grid=grid,
        in_specs=[
            pl.BlockSpec(memory_space=pltpu.MemorySpace.SMEM),   # scal (2,)
            pl.BlockSpec((TILE_B, S), lambda i: (i, 0)),         # state tile (as produced)
            pl.BlockSpec((TILE_B, A), lambda i: (i, 0)),         # action tile (no pad)
            pl.BlockSpec((H1, S), lambda i: (0, 0)),             # resident packed weights
            pl.BlockSpec((H1, 1), lambda i: (0, 0)),
            pl.BlockSpec((H2, H1), lambda i: (0, 0)),
            pl.BlockSpec((H2, 1), lambda i: (0, 0)),
            pl.BlockSpec((OUT, H2), lambda i: (0, 0)),
            pl.BlockSpec((OUT, 1), lambda i: (0, 0)),
        ],
        out_specs=pl.BlockSpec((OUT, TILE_B), lambda i: (0, i)),
        compiler_params=pltpu.CompilerParams(
            dimension_semantics=dims_sem,
            vmem_limit_bytes=vmem_limit,
        ),
    )(scal, state, action,
      packed["w1t"], packed["b1t"], packed["w2t"], packed["b2t"],
      packed["w3t"], packed["b3t"])

    logp_fm = out[:A, :]            # [A, B]  (lane-dense kernel layout)
    value = out[A, :]               # torch.squeeze(state_value): [B]
    # dist_entropy is constant wrt state/action: 0.5 + 0.5*log(2*pi) + log(std).
    ent_const = 0.5 + 0.5 * math.log(2.0 * math.pi) + jnp.log(std)

    if feature_major_out:
        return logp_fm, value, jnp.broadcast_to(ent_const, (A, B))
    # Compatibility path: one small wrapper-side transpose back to torch layout.
    return logp_fm.T, value, jnp.broadcast_to(ent_const, (B, A))


def init_params(key, state_dim, action_dim, na1, na2, nc1, nc2):
    """Deterministic init matching nn.Linear shapes; weights stored [in, out]."""
    def linear(k, fan_in, fan_out):
        kw, kb = jax.random.split(k)
        bound = 1.0 / math.sqrt(fan_in)
        w = jax.random.uniform(kw, (fan_in, fan_out), jnp.float32, -bound, bound)
        b = jax.random.uniform(kb, (1, fan_out), jnp.float32, -bound, bound)
        return w, b

    keys = jax.random.split(key, 6)
    wa1, ba1 = linear(keys[0], state_dim, na1)
    wa2, ba2 = linear(keys[1], na1, na2)
    wa3, ba3 = linear(keys[2], na2, action_dim)
    wc1, bc1 = linear(keys[3], state_dim, nc1)
    wc2, bc2 = linear(keys[4], nc1, nc2)
    wc3, bc3 = linear(keys[5], nc2, 1)
    return dict(wa1=wa1, ba1=ba1, wa2=wa2, ba2=ba2, wa3=wa3, ba3=ba3,
                wc1=wc1, bc1=bc1, wc2=wc2, bc2=bc2, wc3=wc3, bc3=bc3)


def _reference_evaluate(state, action, std_scale, p):
    # Plain-JAX reference mirroring torch semantics for validation.
    h = jnp.maximum(state @ p["wa1"] + p["ba1"], 0.0)
    h = jnp.maximum(h @ p["wa2"] + p["ba2"], 0.0)
    mu = h @ p["wa3"] + p["ba3"]
    g = jnp.maximum(state @ p["wc1"] + p["bc1"], 0.0)
    g = jnp.maximum(g @ p["wc2"] + p["bc2"], 0.0)
    v = g @ p["wc3"] + p["bc3"]
    log_std = jnp.log(std_scale)
    logp = -((action - mu) ** 2) / (2.0 * std_scale**2) - log_std - 0.5 * math.log(2 * math.pi)
    ent = jnp.full_like(mu, 0.5 + 0.5 * math.log(2 * math.pi) + log_std)
    return logp, jnp.squeeze(v, axis=-1), ent


# TODO(synk): act/act_deterministic (random sampling + memory list appends) and the
# cv2 video-recording helpers are host-side control flow, not kernel material.

if __name__ == "__main__":
    state_dim, action_dim = 16, 8
    na1, na2, nc1, nc2 = 32, 32, 32, 32
    batch = 4
    std_scale = 0.5

    key = jax.random.PRNGKey(0)
    kp, ks, ka = jax.random.split(key, 3)
    params = init_params(kp, state_dim, action_dim, na1, na2, nc1, nc2)
    state = jax.random.normal(ks, (batch, state_dim), jnp.float32)
    action = jax.random.normal(ka, (batch, action_dim), jnp.float32)

    r_logp, r_value, r_ent = _reference_evaluate(state, action, std_scale, params)

    # Exact f32 matmul path.
    packed_f32 = pack_params(params, jnp.float32)
    logp, value, ent = actor_critic_evaluate(state, action, std_scale, packed_f32)
    jax.block_until_ready((logp, value, ent))
    assert logp.shape == (batch, action_dim)
    assert value.shape == (batch,)
    assert ent.shape == (batch, action_dim)
    assert jnp.allclose(logp, r_logp, atol=1e-5, rtol=1e-5)
    assert jnp.allclose(value, r_value, atol=1e-5, rtol=1e-5)
    assert jnp.allclose(ent, r_ent, atol=1e-5, rtol=1e-5)

    # Lane-dense (feature-major) output path: what a layout-aware consumer uses.
    logp_fm, value_fm, _ = actor_critic_evaluate(
        state, action, std_scale, packed_f32, feature_major_out=True)
    jax.block_until_ready((logp_fm, value_fm))
    assert logp_fm.shape == (action_dim, batch)
    assert jnp.allclose(logp_fm.T, r_logp, atol=1e-5, rtol=1e-5)
    assert jnp.allclose(value_fm, r_value, atol=1e-5, rtol=1e-5)

    # Default bf16 matmul path (MXU-native on v6e/v7x); producer emits bf16 state,
    # elementwise math stays f32 inside the kernel.
    packed_bf16 = pack_params(params)   # bf16 default
    logp16, value16, ent16 = actor_critic_evaluate(
        state.astype(jnp.bfloat16), action, std_scale, packed_bf16)
    jax.block_until_ready((logp16, value16, ent16))
    assert jnp.allclose(logp16, r_logp, atol=2.5e-1, rtol=5e-2)
    assert jnp.allclose(value16, r_value, atol=2.5e-1, rtol=5e-2)

    print("KERNEL_OK")
</pallas_src>

<mosaic_0001>
module attributes {stable_mosaic.version = 11 : i64} {
  func.func @_actor_critic_kernel(%arg0: i32, %arg1: memref<2xf32, #tpu.memory_space<smem>>, %arg2: memref<128x16xf32, #tpu.memory_space<vmem>>, %arg3: memref<128x8xf32, #tpu.memory_space<vmem>>, %arg4: memref<64x16xf32, #tpu.memory_space<vmem>>, %arg5: memref<64x1xf32, #tpu.memory_space<vmem>>, %arg6: memref<64x64xf32, #tpu.memory_space<vmem>>, %arg7: memref<64x1xf32, #tpu.memory_space<vmem>>, %arg8: memref<9x64xf32, #tpu.memory_space<vmem>>, %arg9: memref<9x1xf32, #tpu.memory_space<vmem>>, %arg10: memref<9x128xf32, #tpu.memory_space<vmem>>) attributes {dimension_semantics = [#tpu.dimension_semantics<parallel>], iteration_bounds = array<i64: 1>, scalar_prefetch = 0 : i64, scratch_operands = 0 : i64, tpu.core_type = #tpu.core_type<tc>, window_params = [{transform_indices = @transform_0, window_bounds = array<i64: 2>}, {transform_indices = @transform_1, window_bounds = array<i64: 128, 16>}, {transform_indices = @transform_2, window_bounds = array<i64: 128, 8>}, {pipeline_mode = #tpu.pipeline_mode<synchronous>, transform_indices = @transform_3, window_bounds = array<i64: 64, 16>}, {pipeline_mode = #tpu.pipeline_mode<synchronous>, transform_indices = @transform_4, window_bounds = array<i64: 64, 1>}, {pipeline_mode = #tpu.pipeline_mode<synchronous>, transform_indices = @transform_5, window_bounds = array<i64: 64, 64>}, {pipeline_mode = #tpu.pipeline_mode<synchronous>, transform_indices = @transform_6, window_bounds = array<i64: 64, 1>}, {pipeline_mode = #tpu.pipeline_mode<synchronous>, transform_indices = @transform_7, window_bounds = array<i64: 9, 64>}, {pipeline_mode = #tpu.pipeline_mode<synchronous>, transform_indices = @transform_8, window_bounds = array<i64: 9, 1>}, {transform_indices = @transform_9, window_bounds = array<i64: 9, 128>}]} {
    %c0 = arith.constant 0 : index
    %c0_0 = arith.constant 0 : index
    %0 = vector.load %arg2[%c0, %c0_0] : memref<128x16xf32, #tpu.memory_space<vmem>>, vector<128x16xf32>
    %1 = tpu.transpose %0, [1, 0] : vector<128x16xf32> -> vector<16x128xf32>
    %c0_1 = arith.constant 0 : index
    %c0_2 = arith.constant 0 : index
    %2 = vector.load %arg3[%c0_1, %c0_2] : memref<128x8xf32, #tpu.memory_space<vmem>>, vector<128x8xf32>
    %3 = tpu.transpose %2, [1, 0] : vector<128x8xf32> -> vector<8x128xf32>
    %c0_3 = arith.constant 0 : index
    %c0_4 = arith.constant 0 : index
    %4 = vector.load %arg4[%c0_3, %c0_4] : memref<64x16xf32, #tpu.memory_space<vmem>>, vector<64x16xf32>
    %cst = arith.constant dense<0.000000e+00> : vector<64x128xf32>
    %5 = tpu.matmul %4, %1, %cst {dimension_numbers = #tpu.dot_dimension_numbers<[1], [0], [0], [1], [0, 0, 1, 1], [], []>} : vector<64x16xf32>, vector<16x128xf32>, vector<64x128xf32> -> vector<64x128xf32>
    %c0_5 = arith.constant 0 : index
    %c0_6 = arith.constant 0 : index
    %6 = vector.load %arg5[%c0_5, %c0_6] : memref<64x1xf32, #tpu.memory_space<vmem>>, vector<64x1xf32>
    %7 = vector.broadcast %6 : vector<64x1xf32> to vector<64x128xf32>
    %8 = arith.addf %5, %7 : vector<64x128xf32>
    %cst_7 = arith.constant 0.000000e+00 : f32
    %9 = vector.broadcast %cst_7 : f32 to vector<64x128xf32>
    %10 = arith.maximumf %8, %9 : vector<64x128xf32>
    %c0_8 = arith.constant 0 : index
    %c0_9 = arith.constant 0 : index
    %11 = vector.load %arg6[%c0_8, %c0_9] : memref<64x64xf32, #tpu.memory_space<vmem>>, vector<64x64xf32>
    %cst_10 = arith.constant dense<0.000000e+00> : vector<64x128xf32>
    %12 = tpu.matmul %11, %10, %cst_10 {dimension_numbers = #tpu.dot_dimension_numbers<[1], [0], [0], [1], [0, 0, 1, 1], [], []>} : vector<64x64xf32>, vector<64x128xf32>, vector<64x128xf32> -> vector<64x128xf32>
    %c0_11 = arith.constant 0 : index
    %c0_12 = arith.constant 0 : index
    %13 = vector.load %arg7[%c0_11, %c0_12] : memref<64x1xf32, #tpu.memory_space<vmem>>, vector<64x1xf32>
    %14 = vector.broadcast %13 : vector<64x1xf32> to vector<64x128xf32>
    %15 = arith.addf %12, %14 : vector<64x128xf32>
    %cst_13 = arith.constant 0.000000e+00 : f32
    %16 = vector.broadcast %cst_13 : f32 to vector<64x128xf32>
    %17 = arith.maximumf %15, %16 : vector<64x128xf32>
    %c0_14 = arith.constant 0 : index
    %c0_15 = arith.constant 0 : index
    %18 = vector.load %arg8[%c0_14, %c0_15] : memref<9x64xf32, #tpu.memory_space<vmem>>, vector<9x64xf32>
    %cst_16 = arith.constant dense<0.000000e+00> : vector<9x128xf32>
    %19 = tpu.matmul %18, %17, %cst_16 {dimension_numbers = #tpu.dot_dimension_numbers<[1], [0], [0], [1], [0, 0, 1, 1], [], []>} : vector<9x64xf32>, vector<64x128xf32>, vector<9x128xf32> -> vector<9x128xf32>
    %c0_17 = arith.constant 0 : index
    %c0_18 = arith.constant 0 : index
    %20 = vector.load %arg9[%c0_17, %c0_18] : memref<9x1xf32, #tpu.memory_space<vmem>>, vector<9x1xf32>
    %21 = vector.broadcast %20 : vector<9x1xf32> to vector<9x128xf32>
    %22 = arith.addf %19, %21 : vector<9x128xf32>
    %c0_19 = arith.constant 0 : index
    %23 = memref.load %arg1[%c0_19] : memref<2xf32, #tpu.memory_space<smem>>
    %c1 = arith.constant 1 : index
    %24 = memref.load %arg1[%c1] : memref<2xf32, #tpu.memory_space<smem>>
    %25 = vector.extract_strided_slice %22 {offsets = [0, 0], sizes = [8, 128], strides = [1, 1]} : vector<9x128xf32> to vector<8x128xf32>
    %26 = arith.subf %3, %25 : vector<8x128xf32>
    %27 = arith.mulf %26, %26 : vector<8x128xf32>
    %28 = vector.broadcast %23 : f32 to vector<8x128xf32>
    %29 = arith.mulf %27, %28 : vector<8x128xf32>
    %30 = vector.broadcast %24 : f32 to vector<8x128xf32>
    %31 = arith.addf %29, %30 : vector<8x128xf32>
    %c0_20 = arith.constant 0 : index
    %c0_21 = arith.constant 0 : index
    %32 = vector.load %arg10[%c0_20, %c0_21] : memref<9x128xf32, #tpu.memory_space<vmem>>, vector<8x128xf32>
    tpu.vector_store %arg10[%c0_20, %c0_21], %31 {strides = array<i32>} : memref<9x128xf32, #tpu.memory_space<vmem>>, vector<8x128xf32>,
    %33 = vector.extract_strided_slice %22 {offsets = [8, 0], sizes = [1, 128], strides = [1, 1]} : vector<9x128xf32> to vector<1x128xf32>
    %c8 = arith.constant 8 : index
    %c0_22 = arith.constant 0 : index
    %34 = vector.load %arg10[%c8, %c0_22] : memref<9x128xf32, #tpu.memory_space<vmem>>, vector<1x128xf32>
    tpu.vector_store %arg10[%c8, %c0_22], %33 {strides = array<i32>} : memref<9x128xf32, #tpu.memory_space<vmem>>, vector<1x128xf32>,
    return
  }
  func.func @transform_0(%arg0: i32) -> i32 {
    %c0_i32 = arith.constant 0 : i32
    %c0_i32_0 = arith.constant 0 : i32
    return %c0_i32 : i32
  }
  func.func @transform_1(%arg0: i32) -> (i32, i32) {
    %c0_i32 = arith.constant 0 : i32
    %c0_i32_0 = arith.constant 0 : i32
    return %arg0, %c0_i32 : i32, i32
  }
  func.func @transform_2(%arg0: i32) -> (i32, i32) {
    %c0_i32 = arith.constant 0 : i32
    %c0_i32_0 = arith.constant 0 : i32
    return %arg0, %c0_i32 : i32, i32
  }
  func.func @transform_3(%arg0: i32) -> (i32, i32) {
    %c0_i32 = arith.constant 0 : i32
    %c0_i32_0 = arith.constant 0 : i32
    %c0_i32_1 = arith.constant 0 : i32
    return %c0_i32, %c0_i32_0 : i32, i32
  }
  func.func @transform_4(%arg0: i32) -> (i32, i32) {
    %c0_i32 = arith.constant 0 : i32
    %c0_i32_0 = arith.constant 0 : i32
    %c0_i32_1 = arith.constant 0 : i32
    return %c0_i32, %c0_i32_0 : i32, i32
  }
  func.func @transform_5(%arg0: i32) -> (i32, i32) {
    %c0_i32 = arith.constant 0 : i32
    %c0_i32_0 = arith.constant 0 : i32
    %c0_i32_1 = arith.constant 0 : i32
    return %c0_i32, %c0_i32_0 : i32, i32
  }
  func.func @transform_6(%arg0: i32) -> (i32, i32) {
    %c0_i32 = arith.constant 0 : i32
    %c0_i32_0 = arith.constant 0 : i32
    %c0_i32_1 = arith.constant 0 : i32
    return %c0_i32, %c0_i32_0 : i32, i32
  }
  func.func @transform_7(%arg0: i32) -> (i32, i32) {
    %c0_i32 = arith.constant 0 : i32
    %c0_i32_0 = arith.constant 0 : i32
    %c0_i32_1 = arith.constant 0 : i32
    return %c0_i32, %c0_i32_0 : i32, i32
  }
  func.func @transform_8(%arg0: i32) -> (i32, i32) {
    %c0_i32 = arith.constant 0 : i32
    %c0_i32_0 = arith.constant 0 : i32
    %c0_i32_1 = arith.constant 0 : i32
    return %c0_i32, %c0_i32_0 : i32, i32
  }
  func.func @transform_9(%arg0: i32) -> (i32, i32) {
    %c0_i32 = arith.constant 0 : i32
    %c0_i32_0 = arith.constant 0 : i32
    return %c0_i32, %arg0 : i32, i32
  }
}

</mosaic_0001>

<llo_original>
// kernel: tpu_custom_call.1
$region0: #{tpu_custom_call.1}
  #allocation0 [shape = 'u32[]', space=smem, size = 0x4, offset = 0x4, fixed_abs, tag = 'smem constant byte address 0x4 - core index']
  #allocation1 [shape = 'u32[144,128]{1,0:T(1,128)}', space=vmem, size = 0x12000, scoped, tag = 'internal scratch']
  %s0 = inlined_call_operand.vmem [shape: f32[2], index: 0, kind: input, shape index: {}]
  %s1 = inlined_call_operand.vmem [shape: f32[4,16], index: 1, kind: input, shape index: {}]
  %s2 = inlined_call_operand.vmem [shape: f32[4,8], index: 2, kind: input, shape index: {}]
  %s3 = inlined_call_operand.vmem [shape: f32[64,16], index: 3, kind: input, shape index: {}]
  %s4 = inlined_call_operand.vmem [shape: f32[64,1], index: 4, kind: input, shape index: {}]
  %s5 = inlined_call_operand.vmem [shape: f32[64,64], index: 5, kind: input, shape index: {}]
  %s6 = inlined_call_operand.vmem [shape: f32[64,1], index: 6, kind: input, shape index: {}]
  %s7 = inlined_call_operand.vmem [shape: f32[9,64], index: 7, kind: input, shape index: {}]
  %s8 = inlined_call_operand.vmem [shape: f32[9,1], index: 8, kind: input, shape index: {}]
  %s9 = inlined_call_operand.vmem [shape: f32[9,4], index: 9, kind: output, shape index: {}]
  %s10 = sld [smem:[#allocation0]]
  $region50: #{tpu_custom_call.1} parent=0
    _
  %s12 = ssub.s32 1, %s10
  %s13 = scalar_select 0, %s12, %s10
  $region1: #{tpu_custom_call.1} parent=0
    #allocation2 [shape = 'u8[512]{0}', space=smem, size = 0x200, scoped, tag = 'input window, operand 0, single buffered']
    #allocation3 [shape = 's32[1]{0}', space=sflag, size = 0x4, scoped, tag = 'scoped memory for tpu_custom_call.1']
    %14 = vsyncpa [#allocation3], 0
    // Predicated region
    $region2: #{tpu_custom_call.1} parent=1 // pred_check
      _
    $region3: #{tpu_custom_call.1} parent=1 // pred_check_branch
      %16 = sbr.rel (0) target = $region5
    $region4: #{tpu_custom_call.1} parent=1 // pred_region
      %s18 = ssub.s32 16, 16
      %19 = vsyncadd [#allocation3], %s18
      %s21 = sshll.u32 %s0, 4
      %s22 = int_to_ptr.vmem [resolvable:$true] %s21
      %24 = dma.vmem_to_smem %s22, 16, [#allocation2], [#allocation3]
    $region5: #{tpu_custom_call.1} parent=1 // pred_fallthru
      _
    // Predicated region
    $region6: #{tpu_custom_call.1} parent=1 // pred_check
      _
    $region7: #{tpu_custom_call.1} parent=1 // pred_check_branch
      %26 = sbr.rel (0) target = $region9
    $region8: #{tpu_custom_call.1} parent=1 // pred_region
      _
    $region9: #{tpu_custom_call.1} parent=1 // pred_fallthru
      _
    // Predicated region
    $region10: #{tpu_custom_call.1} parent=1 // pred_check
      _
    $region11: #{tpu_custom_call.1} parent=1 // pred_check_branch
      %28 = sbr.rel (0) target = $region13
    $region12: #{tpu_custom_call.1} parent=1 // pred_region
      _
    $region13: #{tpu_custom_call.1} parent=1 // pred_fallthru
      _
    // Predicated region
    $region14: #{tpu_custom_call.1} parent=1 // pred_check
      _
    $region15: #{tpu_custom_call.1} parent=1 // pred_check_branch
      %30 = sbr.rel (0) target = $region17
    $region16: #{tpu_custom_call.1} parent=1 // pred_region
      _
    $region17: #{tpu_custom_call.1} parent=1 // pred_fallthru
      _
    // Predicated region
    $region18: #{tpu_custom_call.1} parent=1 // pred_check
      _
    $region19: #{tpu_custom_call.1} parent=1 // pred_check_branch
      %32 = sbr.rel (0) target = $region21
    $region20: #{tpu_custom_call.1} parent=1 // pred_region
      _
    $region21: #{tpu_custom_call.1} parent=1 // pred_fallthru
      _
    // Predicated region
    $region22: #{tpu_custom_call.1} parent=1 // pred_check
      _
    $region23: #{tpu_custom_call.1} parent=1 // pred_check_branch
      %34 = sbr.rel (0) target = $region25
    $region24: #{tpu_custom_call.1} parent=1 // pred_region
      _
    $region25: #{tpu_custom_call.1} parent=1 // pred_fallthru
      _
    // Predicated region
    $region26: #{tpu_custom_call.1} parent=1 // pred_check
      _
    $region27: #{tpu_custom_call.1} parent=1 // pred_check_branch
      %36 = sbr.rel (0) target = $region29
    $region28: #{tpu_custom_call.1} parent=1 // pred_region
      _
    $region29: #{tpu_custom_call.1} parent=1 // pred_fallthru
      _
    // Predicated region
    $region30: #{tpu_custom_call.1} parent=1 // pred_check
      _
    $region31: #{tpu_custom_call.1} parent=1 // pred_check_branch
      %38 = sbr.rel (0) target = $region33
    $region32: #{tpu_custom_call.1} parent=1 // pred_region
      _
    $region33: #{tpu_custom_call.1} parent=1 // pred_fallthru
      _
    // Predicated region
    $region34: #{tpu_custom_call.1} parent=1 // pred_check
      _
    $region35: #{tpu_custom_call.1} parent=1 // pred_check_branch
      %40 = sbr.rel (0) target = $region37
    $region36: #{tpu_custom_call.1} parent=1 // pred_region
      _
    $region37: #{tpu_custom_call.1} parent=1 // pred_fallthru
      _
    // Predicated region
    $region38: #{tpu_custom_call.1} parent=1 // pred_check
      _
    $region39: #{tpu_custom_call.1} parent=1 // pred_check_branch
      %42 = sbr.rel (0) target = $region41
    $region40: #{tpu_custom_call.1} parent=1 // pred_region
      %43 = dma.done [#allocation3], 16
    $region41: #{tpu_custom_call.1} parent=1 // pred_fallthru
      _
    %44 = sfence
    %v45 = vld [vmem:[%s1] sm:$0xff]
    %v46 = vld [vmem:[%s1 + $0x8] sm:$0xff]
    %v47 = vld [vmem:[%s1 + $0x10] sm:$0xff]
    %v48 = vld [vmem:[%s1 + $0x18] sm:$0xff]
    %v49 = vld [vmem:[%s1 + $0x20] sm:$0xff]
    %v50 = vld [vmem:[%s1 + $0x28] sm:$0xff]
    %v51 = vld [vmem:[%s1 + $0x30] sm:$0xff]
    %v52 = vld [vmem:[%s1 + $0x38] sm:$0xff]
    %v53 = vld [vmem:[%s1 + $0x40] sm:$0xff]
    %v54 = vld [vmem:[%s1 + $0x48] sm:$0xff]
    %v55 = vld [vmem:[%s1 + $0x50] sm:$0xff]
    %v56 = vld [vmem:[%s1 + $0x58] sm:$0xff]
    %v57 = vld [vmem:[%s1 + $0x60] sm:$0xff]
    %v58 = vld [vmem:[%s1 + $0x68] sm:$0xff]
    %v59 = vld [vmem:[%s1 + $0x70] sm:$0xff]
    %v60 = vld [vmem:[%s1 + $0x78] sm:$0xff]
    %v61 = vld [vmem:[%s2] sm:$0xff]
    %v62 = vld [vmem:[%s2 + $0x8] sm:$0xff]
    %v63 = vld [vmem:[%s2 + $0x10] sm:$0xff]
    %v64 = vld [vmem:[%s2 + $0x18] sm:$0xff]
    %v65 = vld [vmem:[%s2 + $0x20] sm:$0xff]
    %v66 = vld [vmem:[%s2 + $0x28] sm:$0xff]
    %v67 = vld [vmem:[%s2 + $0x30] sm:$0xff]
    %v68 = vld [vmem:[%s2 + $0x38] sm:$0xff]
    %v69 = vld [vmem:[%s2 + $0x40] sm:$0xff]
    %v70 = vld [vmem:[%s2 + $0x48] sm:$0xff]
    %v71 = vld [vmem:[%s2 + $0x50] sm:$0xff]
    %v72 = vld [vmem:[%s2 + $0x58] sm:$0xff]
    %v73 = vld [vmem:[%s2 + $0x60] sm:$0xff]
    %v74 = vld [vmem:[%s2 + $0x68] sm:$0xff]
    %v75 = vld [vmem:[%s2 + $0x70] sm:$0xff]
    %v76 = vld [vmem:[%s2 + $0x78] sm:$0xff]
    %77 = vxpose.xlu0.b32.start [1/16] %v61, 128
    %78 = vxpose.xlu0.b32.cont [2/16] %v62, 128
    %79 = vxpose.xlu0.b32.cont [3/16] %v63, 128
    %80 = vxpose.xlu0.b32.cont [4/16] %v64, 128
    %81 = vxpose.xlu0.b32.cont [5/16] %v65, 128
    %82 = vxpose.xlu0.b32.cont [6/16] %v66, 128
    %83 = vxpose.xlu0.b32.cont [7/16] %v67, 128
    %84 = vxpose.xlu0.b32.cont [8/16] %v68, 128
    %85 = vxpose.xlu0.b32.cont [9/16] %v69, 128
    %86 = vxpose.xlu0.b32.cont [10/16] %v70, 128
    %87 = vxpose.xlu0.b32.cont [11/16] %v71, 128
    %88 = vxpose.xlu0.b32.cont [12/16] %v72, 128
    %89 = vxpose.xlu0.b32.cont [13/16] %v73, 128
    %90 = vxpose.xlu0.b32.cont [14/16] %v74, 128
    %91 = vxpose.xlu0.b32.cont [15/16] %v75, 128
    %92 = vxpose.xlu0.b32.end [16/16] %v76, 128
    %v93 = vpop.trf.xlu0
    %v94 = vpop.trf.xlu0
    %v95 = vpop.trf.xlu0
    %v96 = vpop.trf.xlu0
    %v97 = vpop.trf.xlu0
    %v98 = vpop.trf.xlu0
    %v99 = vpop.trf.xlu0
    %v100 = vpop.trf.xlu0
    %v101 = vpop.trf.xlu0
    %v102 = vpop.trf.xlu0
    %v103 = vpop.trf.xlu0
    %v104 = vpop.trf.xlu0
    %v105 = vpop.trf.xlu0
    %v106 = vpop.trf.xlu0
    %v107 = vpop.trf.xlu0
    %v108 = vpop.trf.xlu0
    %v109 = vld [vmem:[%s3] sm:$0xff]
    %v110 = vld [vmem:[%s3 + $0x8] sm:$0xff]
    %v111 = vld [vmem:[%s3 + $0x10] sm:$0xff]
    %v112 = vld [vmem:[%s3 + $0x18] sm:$0xff]
    %v113 = vld [vmem:[%s3 + $0x20] sm:$0xff]
    %v114 = vld [vmem:[%s3 + $0x28] sm:$0xff]
    %v115 = vld [vmem:[%s3 + $0x30] sm:$0xff]
    %v116 = vld [vmem:[%s3 + $0x38] sm:$0xff]
    %v117 = vld [vmem:[%s4] sm:$0xff]
    %v118 = vld [vmem:[%s4 + $0x8] sm:$0xff]
    %v119 = vld [vmem:[%s4 + $0x10] sm:$0xff]
    %v120 = vld [vmem:[%s4 + $0x18] sm:$0xff]
    %v121 = vld [vmem:[%s4 + $0x20] sm:$0xff]
    %v122 = vld [vmem:[%s4 + $0x28] sm:$0xff]
    %v123 = vld [vmem:[%s4 + $0x30] sm:$0xff]
    %v124 = vld [vmem:[%s4 + $0x38] sm:$0xff]
    %126 = vset.pattern.permute.xlu0 0
    %127 = vperm.xlu0 %126, %v117
    %v128 = vpop.permute.xlu0 %127
    %131 = vset.pattern.permute.xlu0 0
    %132 = vperm.xlu0 %131, %v118
    %v133 = vpop.permute.xlu0 %132
    %136 = vset.pattern.permute.xlu0 0
    %137 = vperm.xlu0 %136, %v119
    %v138 = vpop.permute.xlu0 %137
    %141 = vset.pattern.permute.xlu0 0
    %142 = vperm.xlu0 %141, %v120
    %v143 = vpop.permute.xlu0 %142
    %146 = vset.pattern.permute.xlu0 0
    %147 = vperm.xlu0 %146, %v121
    %v148 = vpop.permute.xlu0 %147
    %151 = vset.pattern.permute.xlu0 0
    %152 = vperm.xlu0 %151, %v122
    %v153 = vpop.permute.xlu0 %152
    %156 = vset.pattern.permute.xlu0 0
    %157 = vperm.xlu0 %156, %v123
    %v158 = vpop.permute.xlu0 %157
    %161 = vset.pattern.permute.xlu0 0
    %162 = vperm.xlu0 %161, %v124
    %v163 = vpop.permute.xlu0 %162
    %vm165 = vcmask 130048
    %v167 = vsel %vm165, %v109, 0
    %v170 = vsel %vm165, %v110, 0
    %v173 = vsel %vm165, %v111, 0
    %v176 = vsel %vm165, %v112, 0
    %v179 = vsel %vm165, %v113, 0
    %v182 = vsel %vm165, %v114, 0
    %v185 = vsel %vm165, %v115, 0
    %v188 = vsel %vm165, %v116, 0
    %v191 = vsel %vm165, %v45, 0
    %v194 = vsel %vm165, %v46, 0
    %v197 = vsel %vm165, %v47, 0
    %v200 = vsel %vm165, %v48, 0
    %v203 = vsel %vm165, %v49, 0
    %v206 = vsel %vm165, %v50, 0
    %v209 = vsel %vm165, %v51, 0
    %v212 = vsel %vm165, %v52, 0
    %v215 = vsel %vm165, %v53, 0
    %v218 = vsel %vm165, %v54, 0
    %v221 = vsel %vm165, %v55, 0
    %v224 = vsel %vm165, %v56, 0
    %v227 = vsel %vm165, %v57, 0
    %v230 = vsel %vm165, %v58, 0
    %v233 = vsel %vm165, %v59, 0
    %v236 = vsel %vm165, %v60, 0
    %238 = vmatprep.subr.mxu0 0.0
    %239 = vmatpush1.xpose.msra.mxu0 %v236
    %240 = vmatprep.subr.mxu0 0.0
    %241 = vmatpush1.xpose.msra.mxu0 %v233
    %242 = vmatprep.subr.mxu0 0.0
    %243 = vmatpush1.xpose.msra.mxu0 %v230
    %244 = vmatprep.subr.mxu0 0.0
    %245 = vmatpush1.xpose.msra.mxu0 %v227
    %246 = vmatprep.subr.mxu0 0.0
    %247 = vmatpush1.xpose.msra.mxu0 %v224
    %248 = vmatprep.subr.mxu0 0.0
    %249 = vmatpush1.xpose.msra.mxu0 %v221
    %250 = vmatprep.subr.mxu0 0.0
    %251 = vmatpush1.xpose.msra.mxu0 %v218
    %252 = vmatprep.subr.mxu0 0.0
    %253 = vmatpush1.xpose.msra.mxu0 %v215
    %254 = vmatprep.subr.mxu0 0.0
    %255 = vmatpush1.xpose.msra.mxu0 %v212
    %256 = vmatprep.subr.mxu0 0.0
    %257 = vmatpush1.xpose.msra.mxu0 %v209
    %258 = vmatprep.subr.mxu0 0.0
    %259 = vmatpush1.xpose.msra.mxu0 %v206
    %260 = vmatprep.subr.mxu0 0.0
    %261 = vmatpush1.xpose.msra.mxu0 %v203
    %262 = vmatprep.subr.mxu0 0.0
    %263 = vmatpush1.xpose.msra.mxu0 %v200
    %264 = vmatprep.subr.mxu0 0.0
    %265 = vmatpush1.xpose.msra.mxu0 %v197
    %266 = vmatprep.subr.mxu0 0.0
    %267 = vmatpush1.xpose.msra.mxu0 %v194
    %268 = vmatprep.subr.mxu0 0.0
    %269 = vmatpush1.xpose.msra.mxu0 %v191
    %270 = vmatprep.subr.mxu0 0.0
    %271 = vmatpush2.xpose.msra.mxu0 0.0
    %272 = vmatprep.subr.mxu0 0.0
    %273 = vmatpush2.xpose.msra.mxu0 0.0
    %274 = vmatprep.subr.mxu0 0.0
    %275 = vmatpush2.xpose.msra.mxu0 0.0
    %276 = vmatprep.subr.mxu0 0.0
    %277 = vmatpush2.xpose.msra.mxu0 0.0
    %278 = vmatprep.subr.mxu0 0.0
    %279 = vmatpush2.xpose.msra.mxu0 0.0
    %280 = vmatprep.subr.mxu0 0.0
    %281 = vmatpush2.xpose.msra.mxu0 0.0
    %282 = vmatprep.subr.mxu0 0.0
    %283 = vmatpush2.xpose.msra.mxu0 0.0
    %284 = vmatprep.subr.mxu0 0.0
    %285 = vmatpush2.xpose.msra.mxu0 0.0
    %286 = vmatprep.subr.mxu0 0.0
    %287 = vmatpush2.xpose.msra.mxu0 0.0
    %288 = vmatprep.subr.mxu0 0.0
    %289 = vmatpush2.xpose.msra.mxu0 0.0
    %290 = vmatprep.subr.mxu0 0.0
    %291 = vmatpush2.xpose.msra.mxu0 0.0
    %292 = vmatprep.subr.mxu0 0.0
    %293 = vmatpush2.xpose.msra.mxu0 0.0
    %294 = vmatprep.subr.mxu0 0.0
    %295 = vmatpush2.xpose.msra.mxu0 0.0
    %296 = vmatprep.subr.mxu0 0.0
    %297 = vmatpush2.xpose.msra.mxu0 0.0
    %298 = vmatprep.subr.mxu0 0.0
    %299 = vmatpush2.xpose.msra.mxu0 0.0
    %300 = vmatprep.subr.mxu0 0.0
    %301 = vmatpush2.xpose.msra.mxu0 0.0
    %302 = vmatprep.mubr.f32.mxu0 0.0
    %303 = vmatmul.mubr.f32.gmra.mxu0 %v167
    %v304 = vpop.f32.mrf.mxu0
    %v305 = vadd.f32 %v128, %v304
    %v306 = vpop.f32.mrf.mxu0
    %307 = vmatprep.mubr.f32.mxu0 0.0
    %308 = vmatmul.mubr.f32.gmra.mxu0 %v170
    %v309 = vpop.f32.mrf.mxu0
    %v310 = vadd.f32 %v133, %v309
    %v311 = vpop.f32.mrf.mxu0
    %312 = vmatprep.mubr.f32.mxu0 0.0
    %313 = vmatmul.mubr.f32.gmra.mxu0 %v173
    %v314 = vpop.f32.mrf.mxu0
    %v315 = vadd.f32 %v138, %v314
    %v316 = vpop.f32.mrf.mxu0
    %317 = vmatprep.mubr.f32.mxu0 0.0
    %318 = vmatmul.mubr.f32.gmra.mxu0 %v176
    %v319 = vpop.f32.mrf.mxu0
    %v320 = vadd.f32 %v143, %v319
    %v321 = vpop.f32.mrf.mxu0
    %322 = vmatprep.mubr.f32.mxu0 0.0
    %323 = vmatmul.mubr.f32.gmra.mxu0 %v179
    %v324 = vpop.f32.mrf.mxu0
    %v325 = vadd.f32 %v148, %v324
    %v326 = vpop.f32.mrf.mxu0
    %327 = vmatprep.mubr.f32.mxu0 0.0
    %328 = vmatmul.mubr.f32.gmra.mxu0 %v182
    %v329 = vpop.f32.mrf.mxu0
    %v330 = vadd.f32 %v153, %v329
    %v331 = vpop.f32.mrf.mxu0
    %332 = vmatprep.mubr.f32.mxu0 0.0
    %333 = vmatmul.mubr.f32.gmra.mxu0 %v185
    %v334 = vpop.f32.mrf.mxu0
    %v335 = vadd.f32 %v158, %v334
    %v336 = vpop.f32.mrf.mxu0
    %337 = vmatprep.mubr.f32.mxu0 0.0
    %338 = vmatmul.mubr.f32.gmra.mxu0 %v188
    %v339 = vpop.f32.mrf.mxu0
    %v340 = vadd.f32 %v163, %v339
    %v341 = vpop.f32.mrf.mxu0
    %342 = vdwg.mxu0
    %v343 = vmax.f32 %v305, 0.0
    %v344 = vmax.f32 %v310, 0.0
    %v345 = vmax.f32 %v315, 0.0
    %v346 = vmax.f32 %v320, 0.0
    %v347 = vmax.f32 %v325, 0.0
    %v348 = vmax.f32 %v330, 0.0
    %v349 = vmax.f32 %v335, 0.0
    %v350 = vmax.f32 %v340, 0.0
    %v351 = vld [vmem:[%s5] sm:$0xff]
    %v352 = vld [vmem:[%s5 + $0x8] sm:$0xff]
    %v353 = vld [vmem:[%s5 + $0x10] sm:$0xff]
    %v354 = vld [vmem:[%s5 + $0x18] sm:$0xff]
    %v355 = vld [vmem:[%s5 + $0x20] sm:$0xff]
    %v356 = vld [vmem:[%s5 + $0x28] sm:$0xff]
    %v357 = vld [vmem:[%s5 + $0x30] sm:$0xff]
    %v358 = vld [vmem:[%s5 + $0x38] sm:$0xff]
    %v359 = vld [vmem:[%s6] sm:$0xff]
    %v360 = vld [vmem:[%s6 + $0x8] sm:$0xff]
    %v361 = vld [vmem:[%s6 + $0x10] sm:$0xff]
    %v362 = vld [vmem:[%s6 + $0x18] sm:$0xff]
    %v363 = vld [vmem:[%s6 + $0x20] sm:$0xff]
    %v364 = vld [vmem:[%s6 + $0x28] sm:$0xff]
    %v365 = vld [vmem:[%s6 + $0x30] sm:$0xff]
    %v366 = vld [vmem:[%s6 + $0x38] sm:$0xff]
    %368 = vset.pattern.permute.xlu0 0
    %369 = vperm.xlu0 %368, %v359
    %v370 = vpop.permute.xlu0 %369
    %373 = vset.pattern.permute.xlu0 0
    %374 = vperm.xlu0 %373, %v360
    %v375 = vpop.permute.xlu0 %374
    %378 = vset.pattern.permute.xlu0 0
    %379 = vperm.xlu0 %378, %v361
    %v380 = vpop.permute.xlu0 %379
    %383 = vset.pattern.permute.xlu0 0
    %384 = vperm.xlu0 %383, %v362
    %v385 = vpop.permute.xlu0 %384
    %388 = vset.pattern.permute.xlu0 0
    %389 = vperm.xlu0 %388, %v363
    %v390 = vpop.permute.xlu0 %389
    %393 = vset.pattern.permute.xlu0 0
    %394 = vperm.xlu0 %393, %v364
    %v395 = vpop.permute.xlu0 %394
    %398 = vset.pattern.permute.xlu0 0
    %399 = vperm.xlu0 %398, %v365
    %v400 = vpop.permute.xlu0 %399
    %403 = vset.pattern.permute.xlu0 0
    %404 = vperm.xlu0 %403, %v366
    %v405 = vpop.permute.xlu0 %404
    %vm407 = vcmask 523264
    %v409 = vsel %vm407, %v351, 0
    %v412 = vsel %vm407, %v352, 0
    %v415 = vsel %vm407, %v353, 0
    %v418 = vsel %vm407, %v354, 0
    %v421 = vsel %vm407, %v355, 0
    %v424 = vsel %vm407, %v356, 0
    %v427 = vsel %vm407, %v357, 0
    %v430 = vsel %vm407, %v358, 0
    %432 = vmatprep.subr.mxu0 0.0
    %433 = vmatpush1.msra.mxu0 0.0
    %434 = vmatprep.subr.mxu0 0.0
    %435 = vmatpush1.msra.mxu0 0.0
    %436 = vmatprep.subr.mxu0 0.0
    %437 = vmatpush1.msra.mxu0 0.0
    %438 = vmatprep.subr.mxu0 0.0
    %439 = vmatpush1.msra.mxu0 0.0
    %440 = vmatprep.subr.mxu0 0.0
    %441 = vmatpush1.msra.mxu0 0.0
    %442 = vmatprep.subr.mxu0 0.0
    %443 = vmatpush1.msra.mxu0 0.0
    %444 = vmatprep.subr.mxu0 0.0
    %445 = vmatpush1.msra.mxu0 0.0
    %446 = vmatprep.subr.mxu0 0.0
    %447 = vmatpush1.msra.mxu0 0.0
    %448 = vmatprep.subr.mxu0 0.0
    %449 = vmatpush1.msra.mxu0 %v350
    %450 = vmatprep.subr.mxu0 0.0
    %451 = vmatpush1.msra.mxu0 %v349
    %452 = vmatprep.subr.mxu0 0.0
    %453 = vmatpush1.msra.mxu0 %v348
    %454 = vmatprep.subr.mxu0 0.0
    %455 = vmatpush1.msra.mxu0 %v347
    %456 = vmatprep.subr.mxu0 0.0
    %457 = vmatpush1.msra.mxu0 %v346
    %458 = vmatprep.subr.mxu0 0.0
    %459 = vmatpush1.msra.mxu0 %v345
    %460 = vmatprep.subr.mxu0 0.0
    %461 = vmatpush1.msra.mxu0 %v344
    %462 = vmatprep.subr.mxu0 0.0
    %463 = vmatpush1.msra.mxu0 %v343
    %464 = vmatprep.subr.mxu0 0.0
    %465 = vmatpush2.msra.mxu0 0.0
    %466 = vmatprep.subr.mxu0 0.0
    %467 = vmatpush2.msra.mxu0 0.0
    %468 = vmatprep.subr.mxu0 0.0
    %469 = vmatpush2.msra.mxu0 0.0
    %470 = vmatprep.subr.mxu0 0.0
    %471 = vmatpush2.msra.mxu0 0.0
    %472 = vmatprep.subr.mxu0 0.0
    %473 = vmatpush2.msra.mxu0 0.0
    %474 = vmatprep.subr.mxu0 0.0
    %475 = vmatpush2.msra.mxu0 0.0
    %476 = vmatprep.subr.mxu0 0.0
    %477 = vmatpush2.msra.mxu0 0.0
    %478 = vmatprep.subr.mxu0 0.0
    %479 = vmatpush2.msra.mxu0 0.0
    %480 = vmatprep.subr.mxu0 0.0
    %481 = vmatpush2.msra.mxu0 0.0
    %482 = vmatprep.subr.mxu0 0.0
    %483 = vmatpush2.msra.mxu0 0.0
    %484 = vmatprep.subr.mxu0 0.0
    %485 = vmatpush2.msra.mxu0 0.0
    %486 = vmatprep.subr.mxu0 0.0
    %487 = vmatpush2.msra.mxu0 0.0
    %488 = vmatprep.subr.mxu0 0.0
    %489 = vmatpush2.msra.mxu0 0.0
    %490 = vmatprep.subr.mxu0 0.0
    %491 = vmatpush2.msra.mxu0 0.0
    %492 = vmatprep.subr.mxu0 0.0
    %493 = vmatpush2.msra.mxu0 0.0
    %494 = vmatprep.subr.mxu0 0.0
    %495 = vmatpush2.msra.mxu0 0.0
    %496 = vmatprep.mubr.f32.mxu0 0.0
    %497 = vmatmul.mubr.f32.gmra.mxu0 %v409
    %v498 = vpop.f32.mrf.mxu0
    %v499 = vadd.f32 %v370, %v498
    %v500 = vpop.f32.mrf.mxu0
    %501 = vmatprep.mubr.f32.mxu0 0.0
    %502 = vmatmul.mubr.f32.gmra.mxu0 %v412
    %v503 = vpop.f32.mrf.mxu0
    %v504 = vadd.f32 %v375, %v503
    %v505 = vpop.f32.mrf.mxu0
    %506 = vmatprep.mubr.f32.mxu0 0.0
    %507 = vmatmul.mubr.f32.gmra.mxu0 %v415
    %v508 = vpop.f32.mrf.mxu0
    %v509 = vadd.f32 %v380, %v508
    %v510 = vpop.f32.mrf.mxu0
    %511 = vmatprep.mubr.f32.mxu0 0.0
    %512 = vmatmul.mubr.f32.gmra.mxu0 %v418
    %v513 = vpop.f32.mrf.mxu0
    %v514 = vadd.f32 %v385, %v513
    %v515 = vpop.f32.mrf.mxu0
    %516 = vmatprep.mubr.f32.mxu0 0.0
    %517 = vmatmul.mubr.f32.gmra.mxu0 %v421
    %v518 = vpop.f32.mrf.mxu0
    %v519 = vadd.f32 %v390, %v518
    %v520 = vpop.f32.mrf.mxu0
    %521 = vmatprep.mubr.f32.mxu0 0.0
    %522 = vmatmul.mubr.f32.gmra.mxu0 %v424
    %v523 = vpop.f32.mrf.mxu0
    %v524 = vadd.f32 %v395, %v523
    %v525 = vpop.f32.mrf.mxu0
    %526 = vmatprep.mubr.f32.mxu0 0.0
    %527 = vmatmul.mubr.f32.gmra.mxu0 %v427
    %v528 = vpop.f32.mrf.mxu0
    %v529 = vadd.f32 %v400, %v528
    %v530 = vpop.f32.mrf.mxu0
    %531 = vmatprep.mubr.f32.mxu0 0.0
    %532 = vmatmul.mubr.f32.gmra.mxu0 %v430
    %v533 = vpop.f32.mrf.mxu0
    %v534 = vadd.f32 %v405, %v533
    %v535 = vpop.f32.mrf.mxu0
    %536 = vdwg.mxu0
    %v537 = vmax.f32 %v499, 0.0
    %v538 = vmax.f32 %v504, 0.0
    %v539 = vmax.f32 %v509, 0.0
    %v540 = vmax.f32 %v514, 0.0
    %v541 = vmax.f32 %v519, 0.0
    %v542 = vmax.f32 %v524, 0.0
    %v543 = vmax.f32 %v529, 0.0
    %v544 = vmax.f32 %v534, 0.0
    %v545 = vld [vmem:[%s7] sm:$0xff]
    %v546 = vld [vmem:[%s7 + $0x8] sm:$0x1]
    %v547 = vld [vmem:[%s8] sm:$0xff]
    %v548 = vld [vmem:[%s8 + $0x8] sm:$0x1]
    %550 = vset.pattern.permute.xlu0 0
    %551 = vperm.xlu0 %550, %v547
    %v552 = vpop.permute.xlu0 %551
    %555 = vset.pattern.permute.xlu0 0
    %556 = vperm.xlu0 %555, %v548
    %v557 = vpop.permute.xlu0 %556
    %v560 = vsel %vm407, %v545, 0
    %v563 = vsel %vm407, %v546, 0
    %565 = vmatprep.subr.mxu0 0.0
    %566 = vmatpush1.msra.mxu0 0.0
    %567 = vmatprep.subr.mxu0 0.0
    %568 = vmatpush1.msra.mxu0 0.0
    %569 = vmatprep.subr.mxu0 0.0
    %570 = vmatpush1.msra.mxu0 0.0
    %571 = vmatprep.subr.mxu0 0.0
    %572 = vmatpush1.msra.mxu0 0.0
    %573 = vmatprep.subr.mxu0 0.0
    %574 = vmatpush1.msra.mxu0 0.0
    %575 = vmatprep.subr.mxu0 0.0
    %576 = vmatpush1.msra.mxu0 0.0
    %577 = vmatprep.subr.mxu0 0.0
    %578 = vmatpush1.msra.mxu0 0.0
    %579 = vmatprep.subr.mxu0 0.0
    %580 = vmatpush1.msra.mxu0 0.0
    %581 = vmatprep.subr.mxu0 0.0
    %582 = vmatpush1.msra.mxu0 %v544
    %583 = vmatprep.subr.mxu0 0.0
    %584 = vmatpush1.msra.mxu0 %v543
    %585 = vmatprep.subr.mxu0 0.0
    %586 = vmatpush1.msra.mxu0 %v542
    %587 = vmatprep.subr.mxu0 0.0
    %588 = vmatpush1.msra.mxu0 %v541
    %589 = vmatprep.subr.mxu0 0.0
    %590 = vmatpush1.msra.mxu0 %v540
    %591 = vmatprep.subr.mxu0 0.0
    %592 = vmatpush1.msra.mxu0 %v539
    %593 = vmatprep.subr.mxu0 0.0
    %594 = vmatpush1.msra.mxu0 %v538
    %595 = vmatprep.subr.mxu0 0.0
    %596 = vmatpush1.msra.mxu0 %v537
    %597 = vmatprep.subr.mxu0 0.0
    %598 = vmatpush2.msra.mxu0 0.0
    %599 = vmatprep.subr.mxu0 0.0
    %600 = vmatpush2.msra.mxu0 0.0
    %601 = vmatprep.subr.mxu0 0.0
    %602 = vmatpush2.msra.mxu0 0.0
    %603 = vmatprep.subr.mxu0 0.0
    %604 = vmatpush2.msra.mxu0 0.0
    %605 = vmatprep.subr.mxu0 0.0
    %606 = vmatpush2.msra.mxu0 0.0
    %607 = vmatprep.subr.mxu0 0.0
    %608 = vmatpush2.msra.mxu0 0.0
    %609 = vmatprep.subr.mxu0 0.0
    %610 = vmatpush2.msra.mxu0 0.0
    %611 = vmatprep.subr.mxu0 0.0
    %612 = vmatpush2.msra.mxu0 0.0
    %613 = vmatprep.subr.mxu0 0.0
    %614 = vmatpush2.msra.mxu0 0.0
    %615 = vmatprep.subr.mxu0 0.0
    %616 = vmatpush2.msra.mxu0 0.0
    %617 = vmatprep.subr.mxu0 0.0
    %618 = vmatpush2.msra.mxu0 0.0
    %619 = vmatprep.subr.mxu0 0.0
    %620 = vmatpush2.msra.mxu0 0.0
    %621 = vmatprep.subr.mxu0 0.0
    %622 = vmatpush2.msra.mxu0 0.0
    %623 = vmatprep.subr.mxu0 0.0
    %624 = vmatpush2.msra.mxu0 0.0
    %625 = vmatprep.subr.mxu0 0.0
    %626 = vmatpush2.msra.mxu0 0.0
    %627 = vmatprep.subr.mxu0 0.0
    %628 = vmatpush2.msra.mxu0 0.0
    %629 = vmatprep.mubr.f32.mxu0 0.0
    %630 = vmatmul.mubr.f32.gmra.mxu0 %v560
    %v631 = vpop.f32.mrf.mxu0
    %v632 = vadd.f32 %v552, %v631
    %v633 = vpop.f32.mrf.mxu0
    %634 = vmatprep.mubr.f32.mxu0 0.0
    %635 = vmatmul.mubr.f32.gmra.mxu0 %v563
    %v636 = vpop.f32.mrf.mxu0
    %v637 = vadd.f32 %v557, %v636
    %v638 = vpop.f32.mrf.mxu0
    %639 = vdwg.mxu0
    %s640 = sld [smem:[#allocation2]]
    %s641 = sld [smem:[#allocation2 + $0x1]]
    %v642 = vsub.f32 %v93, %v632
    %v643 = vmul.f32 %v642, %v642
    %v644 = vstv %s640
    %v645 = vmul.f32 %v643, %v644
    %v646 = vstv %s641
    %v647 = vadd.f32 %v645, %v646
    %648 = vst [vmem:[%s9] sm:$0xff] %v647
    %649 = vst [vmem:[%s9 + $0x8] sm:$0x1] %v637
    // Predicated region
    $region42: #{tpu_custom_call.1} parent=1 // pred_check
      _
    $region43: #{tpu_custom_call.1} parent=1 // pred_check_branch
      %651 = sbr.rel (0) target = $region45
    $region44: #{tpu_custom_call.1} parent=1 // pred_region
      _
    $region45: #{tpu_custom_call.1} parent=1 // pred_fallthru
      _
    // Predicated region
    $region46: #{tpu_custom_call.1} parent=1 // pred_check
      _
    $region47: #{tpu_custom_call.1} parent=1 // pred_check_branch
      %653 = sbr.rel (0) target = $region49
    $region48: #{tpu_custom_call.1} parent=1 // pred_region
      _
    $region49: #{tpu_custom_call.1} parent=1 // pred_fallthru
      _
    %654 = vsyncpa [#allocation3], 1

</llo_original>
